<compile_context>
chip_gen: v7x
topology: tpu7x:2x2x1
jax: 0.10.0
libtpu: 0.0.40
codegen_flags: <defaults>
</compile_context>

<pallas_src>
import functools
from typing import NamedTuple, Tuple

import jax
import jax.numpy as jnp
from jax.experimental import pallas as pl
from jax.experimental.pallas import tpu as pltpu


# ----------------------------------------------------------------------------
# Host-side helpers (generation-aware padding / tiling / VMEM budgeting).
# ----------------------------------------------------------------------------

def _round_up(n, m):
    return ((n + m - 1) // m) * m


def _cdiv(a, b):
    return -(-a // b)


def _device_kind():
    try:
        return jax.devices()[0].device_kind.lower()
    except Exception:
        return ""


def _num_tensorcores():
    # v7x exposes 2 TensorCores per chip; v5e/v6e expose 1.
    return 2 if "v7" in _device_kind() else 1


def _vmem_capacity_bytes():
    try:
        return int(pltpu.get_tpu_info().vmem_capacity_bytes)
    except Exception:
        return 64 << 20  # conservative default: v7x per-TC VMEM


def _vmem_cap_bytes():
    # ~48 MiB usable on v7x (64 MiB/TC); ~100 MiB on v5e/v6e (128 MiB).
    return (100 << 20) if _vmem_capacity_bytes() >= (96 << 20) else (48 << 20)


def _lane_pad(dim):
    # v6e/v7x MXU tiles are 256x256: pad K/N that are already >128 up to 256 to avoid
    # half-filled MXU passes.  v5e's 4x128^2 MXU stays at 128 (saves VMEM/HBM).
    if dim <= 128:
        return 128
    mult = 128 if "v5" in _device_kind() else 256
    return _round_up(dim, mult)


def _auto_tile_m(batch):
    """Pick the batch tile per generation.

    1 TC (v5e/v6e): the grid is a serial loop -> fewest, biggest tiles.
    2 TCs (v7x): an even number of >=128-row tiles so megacore can split the batch.
    """
    b8 = _round_up(batch, 8)
    num_tc = _num_tensorcores()
    max_tile = 512 if num_tc >= 2 else 1024
    n_tiles = _cdiv(b8, max_tile)
    if num_tc >= 2 and batch >= 256:
        n_tiles = max(n_tiles, 2)
        if n_tiles % 2:
            n_tiles += 1
    tile = _round_up(_cdiv(b8, n_tiles), 8)
    if batch >= 128:
        tile = max(tile, 128)  # never below one MXU LHS pass when the batch permits
    return tile


# ----------------------------------------------------------------------------
# Parameter preparation (do this ONCE per model; reuse across forward calls).
# ----------------------------------------------------------------------------

class PreparedParams(NamedTuple):
    flat_wb: Tuple[jax.Array, ...]  # (w0, b0, ..., wL, bL), padded + cast
    input_dim: int
    num_classes: int
    d_pad: int
    c_pad: int
    compute_dtype: jnp.dtype


def prepare_params(params, *, compute_dtype=jnp.bfloat16):
    """Pad/cast the (W, b) pairs once so per-call cost is only activation padding.

    W is shaped (in_features, out_features) (transposed vs. torch.nn.Linear.weight).
    The -1e30 mask for padded class columns is baked into the final f32 bias: padded
    weight columns are zero, so padded logits become exactly -1e30 and vanish in the
    softmax, with no per-step iota/select inside the kernel.
    """
    compute_dtype = jnp.dtype(compute_dtype)
    input_dim = params[0][0].shape[0]
    num_classes = params[-1][1].shape[0]
    d_pad = _lane_pad(input_dim)
    c_pad = _lane_pad(num_classes)

    flat_wb = []
    for idx, (w, b) in enumerate(params):
        last = idx == len(params) - 1
        out_pad = c_pad if last else d_pad
        w_p = jnp.zeros((d_pad, out_pad), compute_dtype)
        w_p = w_p.at[: w.shape[0], : w.shape[1]].set(w.astype(compute_dtype))
        if last:
            b_p = jnp.full((1, out_pad), -1e30, jnp.float32)
        else:
            b_p = jnp.zeros((1, out_pad), jnp.float32)
        b_p = b_p.at[0, : b.shape[0]].set(b.astype(jnp.float32))
        flat_wb.extend([w_p, b_p])

    return PreparedParams(tuple(flat_wb), input_dim, num_classes, d_pad, c_pad, compute_dtype)


# ----------------------------------------------------------------------------
# Fused kernel.
# ----------------------------------------------------------------------------

def _make_fused_kernel(num_hidden):
    """Fused MLP kernel for a fixed (trace-time) hidden-layer count."""

    def kernel(*refs):
        x_ref = refs[0]
        o_ref = refs[-1]
        wb = refs[1:-1]  # w0, b0, w1, b1, ..., w_last, b_last

        # Running activation lives entirely in VMEM/vregs.
        h = x_ref[...]

        # Hidden layers: Linear -> ReLU (f32 accumulation, f32 bias/ReLU math).
        for l in range(num_hidden):
            w = wb[2 * l][...]
            b = wb[2 * l + 1][...]
            h = jnp.dot(h.astype(w.dtype), w, preferred_element_type=jnp.float32)
            h = jnp.maximum(h + b, 0.0)

        # Final layer: Linear -> LogSoftmax.  Padded-class mask is baked into b (f32),
        # so no iota/select is needed here.
        w = wb[2 * num_hidden][...]
        b = wb[2 * num_hidden + 1][...]
        logits = jnp.dot(h.astype(w.dtype), w, preferred_element_type=jnp.float32) + b

        m = jnp.max(logits, axis=-1, keepdims=True)
        shifted = logits - m
        lse = jnp.log(jnp.sum(jnp.exp(shifted), axis=-1, keepdims=True))
        o_ref[...] = (shifted - lse).astype(o_ref.dtype)

    return kernel


@functools.partial(jax.jit, static_argnames=("tile_m",))
def _fused_forward(x, flat_wb, *, tile_m):
    """x: [batch_pad, d_pad]; flat_wb: padded (w0, b0, ..., wL, bL)."""
    num_layers = len(flat_wb) // 2
    num_hidden = num_layers - 1
    batch_pad, d_pad = x.shape
    c_pad = flat_wb[-1].shape[-1]
    grid = (batch_pad // tile_m,)

    in_specs = [pl.BlockSpec((tile_m, d_pad), lambda i: (i, 0))]
    for arr in flat_wb:
        # Constant block index -> weights/biases stay VMEM-resident across batch tiles.
        # TODO(synk): pipeline_mode=pl.Buffered(1) on these constant blocks would drop the
        # double-buffered copy (halves resident weight VMEM; matters on v7x's 64 MiB).
        in_specs.append(pl.BlockSpec(arr.shape, lambda i: (0, 0)))
    out_specs = pl.BlockSpec((tile_m, c_pad), lambda i: (i, 0))

    # --- advisory cost estimate ---
    flops = 0
    bytes_accessed = x.size * x.dtype.itemsize
    for l in range(num_layers):
        w = flat_wb[2 * l]
        b = flat_wb[2 * l + 1]
        flops += 2 * batch_pad * w.shape[0] * w.shape[1]
        bytes_accessed += w.size * w.dtype.itemsize + b.size * b.dtype.itemsize
    bytes_accessed += batch_pad * c_pad * 4
    cost = pl.CostEstimate(
        flops=flops, transcendentals=batch_pad * c_pad, bytes_accessed=bytes_accessed
    )

    # --- generation-aware VMEM budget ---
    # resident weights (default double-buffering) + double-buffered x/out tiles + headroom.
    resident = sum(a.size * a.dtype.itemsize for a in flat_wb)
    io = tile_m * d_pad * x.dtype.itemsize + tile_m * c_pad * 4
    need = 2 * resident + 2 * io + (2 << 20)
    vmem_limit = int(min(max(need, 8 << 20), _vmem_cap_bytes()))
    # TODO(synk): once resident weights exceed ~40 MiB (v7x) / ~90 MiB (v5e/v6e), add a K
    # (and optionally N) grid axis marked "arbitrary" with an f32 VMEM accumulator +
    # pl.when init/finalize instead of whole-weight residency.

    return pl.pallas_call(
        _make_fused_kernel(num_hidden),
        out_shape=jax.ShapeDtypeStruct((batch_pad, c_pad), jnp.float32),
        grid=grid,
        in_specs=in_specs,
        out_specs=out_specs,
        compiler_params=pltpu.CompilerParams(
            dimension_semantics=("parallel",),
            vmem_limit_bytes=vmem_limit,
        ),
        cost_estimate=cost,
    )(x, *flat_wb)


# ----------------------------------------------------------------------------
# Public forward.
# ----------------------------------------------------------------------------

def linear_classifier_forward(x, params, *, tile_m=None, compute_dtype=jnp.bfloat16):
    """Forward pass of LinearClassifier: (Linear -> ReLU) * (L-1) -> Linear -> LogSoftmax.

    Args:
      x: [batch, input_dim] float32.
      params: a PreparedParams (preferred: build once with prepare_params and reuse) or a
        raw list of (W, b) with W shaped (in_features, out_features).
      tile_m: batch tile (rows per grid step); None -> generation-aware auto pick.
      compute_dtype: MXU input dtype used when preparing raw params (f32 accumulation and
        softmax math regardless).  Ignored when a PreparedParams is passed.

    Returns:
      [batch, num_classes] float32 log-probabilities.
    """
    if not isinstance(params, PreparedParams):
        params = prepare_params(params, compute_dtype=compute_dtype)

    batch = x.shape[0]
    assert x.shape[1] == params.input_dim

    if tile_m is None:
        tile_m = _auto_tile_m(batch)
    tile_m = max(8, _round_up(min(int(tile_m), _round_up(batch, 8)), 8))
    batch_pad = _round_up(batch, tile_m)

    # Per-call work is now only activation padding/casting (layout plumbing).
    x_p = jnp.zeros((batch_pad, params.d_pad), params.compute_dtype)
    x_p = x_p.at[:batch, : params.input_dim].set(x.astype(params.compute_dtype))

    out_pad = _fused_forward(x_p, params.flat_wb, tile_m=int(tile_m))
    return out_pad[:batch, : params.num_classes]


# ----------------------------------------------------------------------------
# Init + reference + self-test.
# ----------------------------------------------------------------------------

def init_params(key, input_dim, num_classes, num_classifier_layers=1):
    """Deterministic init mirroring nn.Linear's U(-1/sqrt(fan_in), 1/sqrt(fan_in))."""
    dims = [(input_dim, input_dim)] * (num_classifier_layers - 1) + [(input_dim, num_classes)]
    params = []
    for fan_in, fan_out in dims:
        key, kw, kb = jax.random.split(key, 3)
        bound = 1.0 / (fan_in ** 0.5)
        w = jax.random.uniform(kw, (fan_in, fan_out), jnp.float32, -bound, bound)
        b = jax.random.uniform(kb, (fan_out,), jnp.float32, -bound, bound)
        params.append((w, b))
    return params


def _reference_forward(x, params):
    """Pure-JAX reference for correctness checking."""
    h = x
    for w, b in params[:-1]:
        h = jax.nn.relu(h @ w + b)
    w, b = params[-1]
    return jax.nn.log_softmax(h @ w + b, axis=-1)


if __name__ == "__main__":
    batch = 16
    input_dim = 32
    num_classes = 10
    num_classifier_layers = 3  # 2 hidden (Linear+ReLU) + 1 final (Linear+LogSoftmax)

    key = jax.random.PRNGKey(0)
    key, kx = jax.random.split(key)
    x = jax.random.normal(kx, (batch, input_dim), jnp.float32)
    params = init_params(key, input_dim, num_classes, num_classifier_layers)
    ref = _reference_forward(x, params)

    # f32 MXU-input path, auto tile (single grid step at this batch size): tight tolerance.
    prep_f32 = prepare_params(params, compute_dtype=jnp.float32)
    log_probs = jax.block_until_ready(linear_classifier_forward(x, prep_f32))
    assert log_probs.shape == (batch, num_classes)
    row_sums = jnp.exp(log_probs).sum(axis=-1)
    assert bool(jnp.allclose(row_sums, 1.0, atol=1e-5)), row_sums
    assert bool(jnp.allclose(log_probs, ref, atol=1e-4, rtol=1e-4)), float(
        jnp.max(jnp.abs(log_probs - ref))
    )

    # Multi-step batch grid (exercises the "parallel" batch axis + resident weights).
    out_tiled = jax.block_until_ready(linear_classifier_forward(x, prep_f32, tile_m=8))
    assert bool(jnp.allclose(out_tiled, ref, atol=1e-4, rtol=1e-4))

    # Default bf16 MXU-input path (f32 accumulation + f32 softmax): looser tolerance.
    prep_bf16 = prepare_params(params)  # compute_dtype=bfloat16 default
    out_bf16 = jax.block_until_ready(linear_classifier_forward(x, prep_bf16))
    assert out_bf16.shape == (batch, num_classes)
    assert bool(jnp.allclose(jnp.exp(out_bf16).sum(axis=-1), 1.0, atol=1e-3))
    assert bool(jnp.allclose(out_bf16, ref, atol=7e-2, rtol=7e-2)), float(
        jnp.max(jnp.abs(out_bf16 - ref))
    )

    print("KERNEL_OK")
</pallas_src>

<mosaic_0001>
module attributes {stable_mosaic.version = 11 : i64} {
  func.func @kernel(%arg0: i32, %arg1: memref<16x128xf32, #tpu.memory_space<vmem>>, %arg2: memref<128x128xf32, #tpu.memory_space<vmem>>, %arg3: memref<1x128xf32, #tpu.memory_space<vmem>>, %arg4: memref<128x128xf32, #tpu.memory_space<vmem>>, %arg5: memref<1x128xf32, #tpu.memory_space<vmem>>, %arg6: memref<128x128xf32, #tpu.memory_space<vmem>>, %arg7: memref<1x128xf32, #tpu.memory_space<vmem>>, %arg8: memref<16x128xf32, #tpu.memory_space<vmem>>) attributes {dimension_semantics = [#tpu.dimension_semantics<parallel>], iteration_bounds = array<i64: 1>, scalar_prefetch = 0 : i64, scratch_operands = 0 : i64, tpu.core_type = #tpu.core_type<tc>, window_params = [{transform_indices = @transform_0, window_bounds = array<i64: 16, 128>}, {pipeline_mode = #tpu.pipeline_mode<synchronous>, transform_indices = @transform_1, window_bounds = array<i64: 128, 128>}, {pipeline_mode = #tpu.pipeline_mode<synchronous>, transform_indices = @transform_2, window_bounds = array<i64: 1, 128>}, {pipeline_mode = #tpu.pipeline_mode<synchronous>, transform_indices = @transform_3, window_bounds = array<i64: 128, 128>}, {pipeline_mode = #tpu.pipeline_mode<synchronous>, transform_indices = @transform_4, window_bounds = array<i64: 1, 128>}, {pipeline_mode = #tpu.pipeline_mode<synchronous>, transform_indices = @transform_5, window_bounds = array<i64: 128, 128>}, {pipeline_mode = #tpu.pipeline_mode<synchronous>, transform_indices = @transform_6, window_bounds = array<i64: 1, 128>}, {transform_indices = @transform_7, window_bounds = array<i64: 16, 128>}]} {
    %c0 = arith.constant 0 : index
    %c0_0 = arith.constant 0 : index
    %0 = vector.load %arg1[%c0, %c0_0] : memref<16x128xf32, #tpu.memory_space<vmem>>, vector<16x128xf32>
    %c0_1 = arith.constant 0 : index
    %c0_2 = arith.constant 0 : index
    %1 = vector.load %arg2[%c0_1, %c0_2] : memref<128x128xf32, #tpu.memory_space<vmem>>, vector<128x128xf32>
    %c0_3 = arith.constant 0 : index
    %c0_4 = arith.constant 0 : index
    %2 = vector.load %arg3[%c0_3, %c0_4] : memref<1x128xf32, #tpu.memory_space<vmem>>, vector<1x128xf32>
    %cst = arith.constant dense<0.000000e+00> : vector<16x128xf32>
    %3 = tpu.matmul %0, %1, %cst {dimension_numbers = #tpu.dot_dimension_numbers<[1], [0], [0], [1], [0, 0, 1, 1], [], []>} : vector<16x128xf32>, vector<128x128xf32>, vector<16x128xf32> -> vector<16x128xf32>
    %4 = vector.broadcast %2 : vector<1x128xf32> to vector<16x128xf32>
    %5 = arith.addf %3, %4 : vector<16x128xf32>
    %cst_5 = arith.constant 0.000000e+00 : f32
    %6 = vector.broadcast %cst_5 : f32 to vector<16x128xf32>
    %7 = arith.maximumf %5, %6 : vector<16x128xf32>
    %c0_6 = arith.constant 0 : index
    %c0_7 = arith.constant 0 : index
    %8 = vector.load %arg4[%c0_6, %c0_7] : memref<128x128xf32, #tpu.memory_space<vmem>>, vector<128x128xf32>
    %c0_8 = arith.constant 0 : index
    %c0_9 = arith.constant 0 : index
    %9 = vector.load %arg5[%c0_8, %c0_9] : memref<1x128xf32, #tpu.memory_space<vmem>>, vector<1x128xf32>
    %cst_10 = arith.constant dense<0.000000e+00> : vector<16x128xf32>
    %10 = tpu.matmul %7, %8, %cst_10 {dimension_numbers = #tpu.dot_dimension_numbers<[1], [0], [0], [1], [0, 0, 1, 1], [], []>} : vector<16x128xf32>, vector<128x128xf32>, vector<16x128xf32> -> vector<16x128xf32>
    %11 = vector.broadcast %9 : vector<1x128xf32> to vector<16x128xf32>
    %12 = arith.addf %10, %11 : vector<16x128xf32>
    %cst_11 = arith.constant 0.000000e+00 : f32
    %13 = vector.broadcast %cst_11 : f32 to vector<16x128xf32>
    %14 = arith.maximumf %12, %13 : vector<16x128xf32>
    %c0_12 = arith.constant 0 : index
    %c0_13 = arith.constant 0 : index
    %15 = vector.load %arg6[%c0_12, %c0_13] : memref<128x128xf32, #tpu.memory_space<vmem>>, vector<128x128xf32>
    %c0_14 = arith.constant 0 : index
    %c0_15 = arith.constant 0 : index
    %16 = vector.load %arg7[%c0_14, %c0_15] : memref<1x128xf32, #tpu.memory_space<vmem>>, vector<1x128xf32>
    %cst_16 = arith.constant dense<0.000000e+00> : vector<16x128xf32>
    %17 = tpu.matmul %14, %15, %cst_16 {dimension_numbers = #tpu.dot_dimension_numbers<[1], [0], [0], [1], [0, 0, 1, 1], [], []>} : vector<16x128xf32>, vector<128x128xf32>, vector<16x128xf32> -> vector<16x128xf32>
    %18 = vector.broadcast %16 : vector<1x128xf32> to vector<16x128xf32>
    %19 = arith.addf %17, %18 : vector<16x128xf32>
    %cst_17 = arith.constant dense<0xFF800000> : vector<16xf32>
    %20 = vector.multi_reduction <maximumf>, %19, %cst_17 [1] : vector<16x128xf32> to vector<16xf32>
    %21 = vector.shape_cast %20 : vector<16xf32> to vector<16x1xf32>
    %22 = vector.broadcast %21 : vector<16x1xf32> to vector<16x128xf32>
    %23 = arith.subf %19, %22 : vector<16x128xf32>
    %24 = math.exp %23 : vector<16x128xf32>
    %cst_18 = arith.constant dense<0.000000e+00> : vector<16xf32>
    %25 = vector.multi_reduction <add>, %24, %cst_18 [1] : vector<16x128xf32> to vector<16xf32>
    %26 = vector.shape_cast %25 : vector<16xf32> to vector<16x1xf32>
    %27 = math.log %26 : vector<16x1xf32>
    %28 = vector.broadcast %27 : vector<16x1xf32> to vector<16x128xf32>
    %29 = arith.subf %23, %28 : vector<16x128xf32>
    %c0_19 = arith.constant 0 : index
    %c0_20 = arith.constant 0 : index
    %30 = vector.load %arg8[%c0_19, %c0_20] : memref<16x128xf32, #tpu.memory_space<vmem>>, vector<16x128xf32>
    tpu.vector_store %arg8[%c0_19, %c0_20], %29 {strides = array<i32>} : memref<16x128xf32, #tpu.memory_space<vmem>>, vector<16x128xf32>,
    return
  }
  func.func @transform_0(%arg0: i32) -> (i32, i32) {
    %c0_i32 = arith.constant 0 : i32
    %c0_i32_0 = arith.constant 0 : i32
    return %arg0, %c0_i32 : i32, i32
  }
  func.func @transform_1(%arg0: i32) -> (i32, i32) {
    %c0_i32 = arith.constant 0 : i32
    %c0_i32_0 = arith.constant 0 : i32
    %c0_i32_1 = arith.constant 0 : i32
    return %c0_i32, %c0_i32_0 : i32, i32
  }
  func.func @transform_2(%arg0: i32) -> (i32, i32) {
    %c0_i32 = arith.constant 0 : i32
    %c0_i32_0 = arith.constant 0 : i32
    %c0_i32_1 = arith.constant 0 : i32
    return %c0_i32, %c0_i32_0 : i32, i32
  }
  func.func @transform_3(%arg0: i32) -> (i32, i32) {
    %c0_i32 = arith.constant 0 : i32
    %c0_i32_0 = arith.constant 0 : i32
    %c0_i32_1 = arith.constant 0 : i32
    return %c0_i32, %c0_i32_0 : i32, i32
  }
  func.func @transform_4(%arg0: i32) -> (i32, i32) {
    %c0_i32 = arith.constant 0 : i32
    %c0_i32_0 = arith.constant 0 : i32
    %c0_i32_1 = arith.constant 0 : i32
    return %c0_i32, %c0_i32_0 : i32, i32
  }
  func.func @transform_5(%arg0: i32) -> (i32, i32) {
    %c0_i32 = arith.constant 0 : i32
    %c0_i32_0 = arith.constant 0 : i32
    %c0_i32_1 = arith.constant 0 : i32
    return %c0_i32, %c0_i32_0 : i32, i32
  }
  func.func @transform_6(%arg0: i32) -> (i32, i32) {
    %c0_i32 = arith.constant 0 : i32
    %c0_i32_0 = arith.constant 0 : i32
    %c0_i32_1 = arith.constant 0 : i32
    return %c0_i32, %c0_i32_0 : i32, i32
  }
  func.func @transform_7(%arg0: i32) -> (i32, i32) {
    %c0_i32 = arith.constant 0 : i32
    %c0_i32_0 = arith.constant 0 : i32
    return %arg0, %c0_i32 : i32, i32
  }
}

</mosaic_0001>

<llo_original>
// kernel: _fused_forward.1
$region0: #{_fused_forward.1}
  #allocation0 [shape = 'u32[]', space=smem, size = 0x4, offset = 0x4, fixed_abs, tag = 'smem constant byte address 0x4 - core index']
  #allocation1 [shape = 'u32[144,128]{1,0:T(1,128)}', space=vmem, size = 0x12000, scoped, tag = 'internal scratch']
  %s0 = inlined_call_operand.hbm [shape: f32[16,128], index: 0, kind: input, shape index: {}]
  %s1 = inlined_call_operand.hbm [shape: f32[128,128], index: 1, kind: input, shape index: {}]
  %s2 = inlined_call_operand.vmem [shape: f32[1,128], index: 2, kind: input, shape index: {}]
  %s3 = inlined_call_operand.hbm [shape: f32[128,128], index: 3, kind: input, shape index: {}]
  %s4 = inlined_call_operand.vmem [shape: f32[1,128], index: 4, kind: input, shape index: {}]
  %s5 = inlined_call_operand.hbm [shape: f32[128,128], index: 5, kind: input, shape index: {}]
  %s6 = inlined_call_operand.vmem [shape: f32[1,128], index: 6, kind: input, shape index: {}]
  %s7 = inlined_call_operand.hbm [shape: f32[16,128], index: 7, kind: output, shape index: {}]
  %s8 = sld [smem:[#allocation0]]
  $region54: #{_fused_forward.1} parent=0
    _
  %s10 = ssub.s32 1, %s8
  %s11 = scalar_select 0, %s10, %s8
  $region1: #{_fused_forward.1} parent=0
    #allocation2 [shape = 'u8[8192]{0}', space=vmem, size = 0x2000, scoped, tag = 'input window, operand 0, single buffered']
    #allocation3 [shape = 's32[1]{0}', space=sflag, size = 0x4, scoped, tag = 'scoped memory for _fused_forward.1']
    #allocation4 [shape = 's32[1]{0}', space=sflag, size = 0x4, scoped, tag = 'scoped memory for _fused_forward.1']
    #allocation5 [shape = 'u8[65536]{0}', space=vmem, size = 0x10000, scoped, tag = 'input window, operand 1, single buffered']
    #allocation6 [shape = 's32[1]{0}', space=sflag, size = 0x4, scoped, tag = 'scoped memory for _fused_forward.1']
    #allocation7 [shape = 'u8[65536]{0}', space=vmem, size = 0x10000, scoped, tag = 'input window, operand 3, single buffered']
    #allocation8 [shape = 'u8[65536]{0}', space=vmem, size = 0x10000, scoped, tag = 'input window, operand 5, single buffered']
    #allocation9 [shape = 's32[1]{0}', space=sflag, size = 0x4, scoped, tag = 'scoped memory for _fused_forward.1']
    #allocation10 [shape = 'u8[8192]{0}', space=vmem, size = 0x2000, scoped, tag = 'output window, operand 0, single buffered']
    %12 = vsyncpa [#allocation3], 0
    %13 = vsyncpa [#allocation6], 0
    %14 = vsyncpa [#allocation9], 0
    %15 = vsyncpa [#allocation4], 0
    // Predicated region
    $region2: #{_fused_forward.1} parent=1 // pred_check
      _
    $region3: #{_fused_forward.1} parent=1 // pred_check_branch
      %17 = sbr.rel (0) target = $region5
    $region4: #{_fused_forward.1} parent=1 // pred_region
      %s19 = ssub.s32 256, 256
      %20 = vsyncadd [#allocation3], %s19
      %s21 = sshll.u32 [#allocation2], 4
      %s22 = int_to_ptr.vmem [resolvable:$true] %s21
      %27 = dma.hbm_to_vmem [thread:$0]  %s0, 256, %s22, [#allocation3], 128, 128, 8
    $region5: #{_fused_forward.1} parent=1 // pred_fallthru
      _
    // Predicated region
    $region6: #{_fused_forward.1} parent=1 // pred_check
      _
    $region7: #{_fused_forward.1} parent=1 // pred_check_branch
      %29 = sbr.rel (0) target = $region9
    $region8: #{_fused_forward.1} parent=1 // pred_region
      %s31 = ssub.s32 2048, 2048
      %32 = vsyncadd [#allocation6], %s31
      %s33 = sshll.u32 [#allocation5], 4
      %s34 = int_to_ptr.vmem [resolvable:$true] %s33
      %39 = dma.hbm_to_vmem [thread:$0]  %s1, 2048, %s34, [#allocation6], 128, 128, 8
    $region9: #{_fused_forward.1} parent=1 // pred_fallthru
      _
    // Predicated region
    $region10: #{_fused_forward.1} parent=1 // pred_check
      _
    $region11: #{_fused_forward.1} parent=1 // pred_check_branch
      %41 = sbr.rel (0) target = $region13
    $region12: #{_fused_forward.1} parent=1 // pred_region
      _
    $region13: #{_fused_forward.1} parent=1 // pred_fallthru
      _
    // Predicated region
    $region14: #{_fused_forward.1} parent=1 // pred_check
      _
    $region15: #{_fused_forward.1} parent=1 // pred_check_branch
      %43 = sbr.rel (0) target = $region17
    $region16: #{_fused_forward.1} parent=1 // pred_region
      %s45 = ssub.s32 2048, 2048
      %46 = vsyncadd [#allocation6], %s45
      %s47 = sshll.u32 [#allocation7], 4
      %s48 = int_to_ptr.vmem [resolvable:$true] %s47
      %53 = dma.hbm_to_vmem [thread:$0]  %s3, 2048, %s48, [#allocation6], 128, 128, 8
    $region17: #{_fused_forward.1} parent=1 // pred_fallthru
      _
    // Predicated region
    $region18: #{_fused_forward.1} parent=1 // pred_check
      _
    $region19: #{_fused_forward.1} parent=1 // pred_check_branch
      %55 = sbr.rel (0) target = $region21
    $region20: #{_fused_forward.1} parent=1 // pred_region
      _
    $region21: #{_fused_forward.1} parent=1 // pred_fallthru
      _
    // Predicated region
    $region22: #{_fused_forward.1} parent=1 // pred_check
      _
    $region23: #{_fused_forward.1} parent=1 // pred_check_branch
      %57 = sbr.rel (0) target = $region25
    $region24: #{_fused_forward.1} parent=1 // pred_region
      %s59 = ssub.s32 2048, 2048
      %60 = vsyncadd [#allocation9], %s59
      %s61 = sshll.u32 [#allocation8], 4
      %s62 = int_to_ptr.vmem [resolvable:$true] %s61
      %67 = dma.hbm_to_vmem [thread:$0]  %s5, 2048, %s62, [#allocation9], 128, 128, 8
    $region25: #{_fused_forward.1} parent=1 // pred_fallthru
      _
    // Predicated region
    $region26: #{_fused_forward.1} parent=1 // pred_check
      _
    $region27: #{_fused_forward.1} parent=1 // pred_check_branch
      %69 = sbr.rel (0) target = $region29
    $region28: #{_fused_forward.1} parent=1 // pred_region
      _
    $region29: #{_fused_forward.1} parent=1 // pred_fallthru
      _
    // Predicated region
    $region30: #{_fused_forward.1} parent=1 // pred_check
      _
    $region31: #{_fused_forward.1} parent=1 // pred_check_branch
      %71 = sbr.rel (0) target = $region33
    $region32: #{_fused_forward.1} parent=1 // pred_region
      %72 = dma.done [#allocation3], 256
    $region33: #{_fused_forward.1} parent=1 // pred_fallthru
      _
    // Predicated region
    $region34: #{_fused_forward.1} parent=1 // pred_check
      _
    $region35: #{_fused_forward.1} parent=1 // pred_check_branch
      %74 = sbr.rel (0) target = $region37
    $region36: #{_fused_forward.1} parent=1 // pred_region
      %75 = dma.done [#allocation6], 2048
    $region37: #{_fused_forward.1} parent=1 // pred_fallthru
      _
    // Predicated region
    $region38: #{_fused_forward.1} parent=1 // pred_check
      _
    $region39: #{_fused_forward.1} parent=1 // pred_check_branch
      %77 = sbr.rel (0) target = $region41
    $region40: #{_fused_forward.1} parent=1 // pred_region
      %78 = dma.done [#allocation6], 2048
    $region41: #{_fused_forward.1} parent=1 // pred_fallthru
      _
    // Predicated region
    $region42: #{_fused_forward.1} parent=1 // pred_check
      _
    $region43: #{_fused_forward.1} parent=1 // pred_check_branch
      %80 = sbr.rel (0) target = $region45
    $region44: #{_fused_forward.1} parent=1 // pred_region
      %81 = dma.done [#allocation9], 2048
    $region45: #{_fused_forward.1} parent=1 // pred_fallthru
      _
    %v82 = vld [vmem:[#allocation2] sm:$0xff]
    %v83 = vld [vmem:[#allocation2 + $0x8] sm:$0xff]
    %v84 = vld [vmem:[#allocation5] sm:$0xff]
    %v85 = vld [vmem:[#allocation5 + $0x8] sm:$0xff]
    %v86 = vld [vmem:[#allocation5 + $0x10] sm:$0xff]
    %v87 = vld [vmem:[#allocation5 + $0x18] sm:$0xff]
    %v88 = vld [vmem:[#allocation5 + $0x20] sm:$0xff]
    %v89 = vld [vmem:[#allocation5 + $0x28] sm:$0xff]
    %v90 = vld [vmem:[#allocation5 + $0x30] sm:$0xff]
    %v91 = vld [vmem:[#allocation5 + $0x38] sm:$0xff]
    %v92 = vld [vmem:[#allocation5 + $0x40] sm:$0xff]
    %v93 = vld [vmem:[#allocation5 + $0x48] sm:$0xff]
    %v94 = vld [vmem:[#allocation5 + $0x50] sm:$0xff]
    %v95 = vld [vmem:[#allocation5 + $0x58] sm:$0xff]
    %v96 = vld [vmem:[#allocation5 + $0x60] sm:$0xff]
    %v97 = vld [vmem:[#allocation5 + $0x68] sm:$0xff]
    %v98 = vld [vmem:[#allocation5 + $0x70] sm:$0xff]
    %v99 = vld [vmem:[#allocation5 + $0x78] sm:$0xff]
    %v100 = vld [vmem:[%s2] sm:$0x1]
    %v102 = vlaneseq
    %v103 = vshrl.u32 %v102, 7
    %v104 = vsub.s32 0, %v103
    %v105 = vrot.slane %v100, %v104
    %107 = vmatprep.subr.mxu0 0.0
    %108 = vmatpush1.msra.mxu0 %v84
    %109 = vmatprep.subr.mxu0 0.0
    %110 = vmatpush1.msra.mxu0 %v85
    %111 = vmatprep.subr.mxu0 0.0
    %112 = vmatpush1.msra.mxu0 %v86
    %113 = vmatprep.subr.mxu0 0.0
    %114 = vmatpush1.msra.mxu0 %v87
    %115 = vmatprep.subr.mxu0 0.0
    %116 = vmatpush1.msra.mxu0 %v88
    %117 = vmatprep.subr.mxu0 0.0
    %118 = vmatpush1.msra.mxu0 %v89
    %119 = vmatprep.subr.mxu0 0.0
    %120 = vmatpush1.msra.mxu0 %v90
    %121 = vmatprep.subr.mxu0 0.0
    %122 = vmatpush1.msra.mxu0 %v91
    %123 = vmatprep.subr.mxu0 0.0
    %124 = vmatpush1.msra.mxu0 %v92
    %125 = vmatprep.subr.mxu0 0.0
    %126 = vmatpush1.msra.mxu0 %v93
    %127 = vmatprep.subr.mxu0 0.0
    %128 = vmatpush1.msra.mxu0 %v94
    %129 = vmatprep.subr.mxu0 0.0
    %130 = vmatpush1.msra.mxu0 %v95
    %131 = vmatprep.subr.mxu0 0.0
    %132 = vmatpush1.msra.mxu0 %v96
    %133 = vmatprep.subr.mxu0 0.0
    %134 = vmatpush1.msra.mxu0 %v97
    %135 = vmatprep.subr.mxu0 0.0
    %136 = vmatpush1.msra.mxu0 %v98
    %137 = vmatprep.subr.mxu0 0.0
    %138 = vmatpush1.msra.mxu0 %v99
    %139 = vmatprep.subr.mxu0 0.0
    %140 = vmatpush1.msra.mxu0 0.0
    %141 = vmatprep.subr.mxu0 0.0
    %142 = vmatpush1.msra.mxu0 0.0
    %143 = vmatprep.subr.mxu0 0.0
    %144 = vmatpush1.msra.mxu0 0.0
    %145 = vmatprep.subr.mxu0 0.0
    %146 = vmatpush1.msra.mxu0 0.0
    %147 = vmatprep.subr.mxu0 0.0
    %148 = vmatpush1.msra.mxu0 0.0
    %149 = vmatprep.subr.mxu0 0.0
    %150 = vmatpush1.msra.mxu0 0.0
    %151 = vmatprep.subr.mxu0 0.0
    %152 = vmatpush1.msra.mxu0 0.0
    %153 = vmatprep.subr.mxu0 0.0
    %154 = vmatpush1.msra.mxu0 0.0
    %155 = vmatprep.subr.mxu0 0.0
    %156 = vmatpush1.msra.mxu0 0.0
    %157 = vmatprep.subr.mxu0 0.0
    %158 = vmatpush1.msra.mxu0 0.0
    %159 = vmatprep.subr.mxu0 0.0
    %160 = vmatpush1.msra.mxu0 0.0
    %161 = vmatprep.subr.mxu0 0.0
    %162 = vmatpush1.msra.mxu0 0.0
    %163 = vmatprep.subr.mxu0 0.0
    %164 = vmatpush1.msra.mxu0 0.0
    %165 = vmatprep.subr.mxu0 0.0
    %166 = vmatpush1.msra.mxu0 0.0
    %167 = vmatprep.subr.mxu0 0.0
    %168 = vmatpush1.msra.mxu0 0.0
    %169 = vmatprep.subr.mxu0 0.0
    %170 = vmatpush1.msra.mxu0 0.0
    %171 = vmatprep.mubr.f32.mxu0 0.0
    %172 = vmatmul.mubr.f32.gmra.mrb[0].mxu0 %v82
    %v173 = vpop.f32.mrb[0].mxu0
    %v174 = vadd.f32 %v105, %v173
    %v175 = vpop.f32.mrb[0].mxu0
    %176 = vmatprep.mubr.f32.mxu0 0.0
    %177 = vmatmul.mubr.f32.gmra.mrb[0].mxu0 %v83
    %v178 = vpop.f32.mrb[0].mxu0
    %v179 = vadd.f32 %v105, %v178
    %v180 = vpop.f32.mrb[0].mxu0
    %181 = vdwg.mxu0
    %v182 = vmax.f32 %v174, 0.0
    %v183 = vmax.f32 %v179, 0.0
    %v184 = vld [vmem:[#allocation7] sm:$0xff]
    %v185 = vld [vmem:[#allocation7 + $0x8] sm:$0xff]
    %v186 = vld [vmem:[#allocation7 + $0x10] sm:$0xff]
    %v187 = vld [vmem:[#allocation7 + $0x18] sm:$0xff]
    %v188 = vld [vmem:[#allocation7 + $0x20] sm:$0xff]
    %v189 = vld [vmem:[#allocation7 + $0x28] sm:$0xff]
    %v190 = vld [vmem:[#allocation7 + $0x30] sm:$0xff]
    %v191 = vld [vmem:[#allocation7 + $0x38] sm:$0xff]
    %v192 = vld [vmem:[#allocation7 + $0x40] sm:$0xff]
    %v193 = vld [vmem:[#allocation7 + $0x48] sm:$0xff]
    %v194 = vld [vmem:[#allocation7 + $0x50] sm:$0xff]
    %v195 = vld [vmem:[#allocation7 + $0x58] sm:$0xff]
    %v196 = vld [vmem:[#allocation7 + $0x60] sm:$0xff]
    %v197 = vld [vmem:[#allocation7 + $0x68] sm:$0xff]
    %v198 = vld [vmem:[#allocation7 + $0x70] sm:$0xff]
    %v199 = vld [vmem:[#allocation7 + $0x78] sm:$0xff]
    %v200 = vld [vmem:[%s4] sm:$0x1]
    %v202 = vlaneseq
    %v203 = vshrl.u32 %v202, 7
    %v204 = vsub.s32 0, %v203
    %v205 = vrot.slane %v200, %v204
    %207 = vmatprep.subr.mxu0 0.0
    %208 = vmatpush1.msra.mxu0 %v184
    %209 = vmatprep.subr.mxu0 0.0
    %210 = vmatpush1.msra.mxu0 %v185
    %211 = vmatprep.subr.mxu0 0.0
    %212 = vmatpush1.msra.mxu0 %v186
    %213 = vmatprep.subr.mxu0 0.0
    %214 = vmatpush1.msra.mxu0 %v187
    %215 = vmatprep.subr.mxu0 0.0
    %216 = vmatpush1.msra.mxu0 %v188
    %217 = vmatprep.subr.mxu0 0.0
    %218 = vmatpush1.msra.mxu0 %v189
    %219 = vmatprep.subr.mxu0 0.0
    %220 = vmatpush1.msra.mxu0 %v190
    %221 = vmatprep.subr.mxu0 0.0
    %222 = vmatpush1.msra.mxu0 %v191
    %223 = vmatprep.subr.mxu0 0.0
    %224 = vmatpush1.msra.mxu0 %v192
    %225 = vmatprep.subr.mxu0 0.0
    %226 = vmatpush1.msra.mxu0 %v193
    %227 = vmatprep.subr.mxu0 0.0
    %228 = vmatpush1.msra.mxu0 %v194
    %229 = vmatprep.subr.mxu0 0.0
    %230 = vmatpush1.msra.mxu0 %v195
    %231 = vmatprep.subr.mxu0 0.0
    %232 = vmatpush1.msra.mxu0 %v196
    %233 = vmatprep.subr.mxu0 0.0
    %234 = vmatpush1.msra.mxu0 %v197
    %235 = vmatprep.subr.mxu0 0.0
    %236 = vmatpush1.msra.mxu0 %v198
    %237 = vmatprep.subr.mxu0 0.0
    %238 = vmatpush1.msra.mxu0 %v199
    %239 = vmatprep.subr.mxu0 0.0
    %240 = vmatpush1.msra.mxu0 0.0
    %241 = vmatprep.subr.mxu0 0.0
    %242 = vmatpush1.msra.mxu0 0.0
    %243 = vmatprep.subr.mxu0 0.0
    %244 = vmatpush1.msra.mxu0 0.0
    %245 = vmatprep.subr.mxu0 0.0
    %246 = vmatpush1.msra.mxu0 0.0
    %247 = vmatprep.subr.mxu0 0.0
    %248 = vmatpush1.msra.mxu0 0.0
    %249 = vmatprep.subr.mxu0 0.0
    %250 = vmatpush1.msra.mxu0 0.0
    %251 = vmatprep.subr.mxu0 0.0
    %252 = vmatpush1.msra.mxu0 0.0
    %253 = vmatprep.subr.mxu0 0.0
    %254 = vmatpush1.msra.mxu0 0.0
    %255 = vmatprep.subr.mxu0 0.0
    %256 = vmatpush1.msra.mxu0 0.0
    %257 = vmatprep.subr.mxu0 0.0
    %258 = vmatpush1.msra.mxu0 0.0
    %259 = vmatprep.subr.mxu0 0.0
    %260 = vmatpush1.msra.mxu0 0.0
    %261 = vmatprep.subr.mxu0 0.0
    %262 = vmatpush1.msra.mxu0 0.0
    %263 = vmatprep.subr.mxu0 0.0
    %264 = vmatpush1.msra.mxu0 0.0
    %265 = vmatprep.subr.mxu0 0.0
    %266 = vmatpush1.msra.mxu0 0.0
    %267 = vmatprep.subr.mxu0 0.0
    %268 = vmatpush1.msra.mxu0 0.0
    %269 = vmatprep.subr.mxu0 0.0
    %270 = vmatpush1.msra.mxu0 0.0
    %271 = vmatprep.mubr.f32.mxu0 0.0
    %272 = vmatmul.mubr.f32.gmra.mrb[0].mxu0 %v182
    %v273 = vpop.f32.mrb[0].mxu0
    %v274 = vadd.f32 %v205, %v273
    %v275 = vpop.f32.mrb[0].mxu0
    %276 = vmatprep.mubr.f32.mxu0 0.0
    %277 = vmatmul.mubr.f32.gmra.mrb[0].mxu0 %v183
    %v278 = vpop.f32.mrb[0].mxu0
    %v279 = vadd.f32 %v205, %v278
    %v280 = vpop.f32.mrb[0].mxu0
    %281 = vdwg.mxu0
    %v282 = vmax.f32 %v274, 0.0
    %v283 = vmax.f32 %v279, 0.0
    %v284 = vld [vmem:[#allocation8] sm:$0xff]
    %v285 = vld [vmem:[#allocation8 + $0x8] sm:$0xff]
    %v286 = vld [vmem:[#allocation8 + $0x10] sm:$0xff]
    %v287 = vld [vmem:[#allocation8 + $0x18] sm:$0xff]
    %v288 = vld [vmem:[#allocation8 + $0x20] sm:$0xff]
    %v289 = vld [vmem:[#allocation8 + $0x28] sm:$0xff]
    %v290 = vld [vmem:[#allocation8 + $0x30] sm:$0xff]
    %v291 = vld [vmem:[#allocation8 + $0x38] sm:$0xff]
    %v292 = vld [vmem:[#allocation8 + $0x40] sm:$0xff]
    %v293 = vld [vmem:[#allocation8 + $0x48] sm:$0xff]
    %v294 = vld [vmem:[#allocation8 + $0x50] sm:$0xff]
    %v295 = vld [vmem:[#allocation8 + $0x58] sm:$0xff]
    %v296 = vld [vmem:[#allocation8 + $0x60] sm:$0xff]
    %v297 = vld [vmem:[#allocation8 + $0x68] sm:$0xff]
    %v298 = vld [vmem:[#allocation8 + $0x70] sm:$0xff]
    %v299 = vld [vmem:[#allocation8 + $0x78] sm:$0xff]
    %v300 = vld [vmem:[%s6] sm:$0x1]
    %v302 = vlaneseq
    %v303 = vshrl.u32 %v302, 7
    %v304 = vsub.s32 0, %v303
    %v305 = vrot.slane %v300, %v304
    %307 = vmatprep.subr.mxu0 0.0
    %308 = vmatpush1.msra.mxu0 %v284
    %309 = vmatprep.subr.mxu0 0.0
    %310 = vmatpush1.msra.mxu0 %v285
    %311 = vmatprep.subr.mxu0 0.0
    %312 = vmatpush1.msra.mxu0 %v286
    %313 = vmatprep.subr.mxu0 0.0
    %314 = vmatpush1.msra.mxu0 %v287
    %315 = vmatprep.subr.mxu0 0.0
    %316 = vmatpush1.msra.mxu0 %v288
    %317 = vmatprep.subr.mxu0 0.0
    %318 = vmatpush1.msra.mxu0 %v289
    %319 = vmatprep.subr.mxu0 0.0
    %320 = vmatpush1.msra.mxu0 %v290
    %321 = vmatprep.subr.mxu0 0.0
    %322 = vmatpush1.msra.mxu0 %v291
    %323 = vmatprep.subr.mxu0 0.0
    %324 = vmatpush1.msra.mxu0 %v292
    %325 = vmatprep.subr.mxu0 0.0
    %326 = vmatpush1.msra.mxu0 %v293
    %327 = vmatprep.subr.mxu0 0.0
    %328 = vmatpush1.msra.mxu0 %v294
    %329 = vmatprep.subr.mxu0 0.0
    %330 = vmatpush1.msra.mxu0 %v295
    %331 = vmatprep.subr.mxu0 0.0
    %332 = vmatpush1.msra.mxu0 %v296
    %333 = vmatprep.subr.mxu0 0.0
    %334 = vmatpush1.msra.mxu0 %v297
    %335 = vmatprep.subr.mxu0 0.0
    %336 = vmatpush1.msra.mxu0 %v298
    %337 = vmatprep.subr.mxu0 0.0
    %338 = vmatpush1.msra.mxu0 %v299
    %339 = vmatprep.subr.mxu0 0.0
    %340 = vmatpush1.msra.mxu0 0.0
    %341 = vmatprep.subr.mxu0 0.0
    %342 = vmatpush1.msra.mxu0 0.0
    %343 = vmatprep.subr.mxu0 0.0
    %344 = vmatpush1.msra.mxu0 0.0
    %345 = vmatprep.subr.mxu0 0.0
    %346 = vmatpush1.msra.mxu0 0.0
    %347 = vmatprep.subr.mxu0 0.0
    %348 = vmatpush1.msra.mxu0 0.0
    %349 = vmatprep.subr.mxu0 0.0
    %350 = vmatpush1.msra.mxu0 0.0
    %351 = vmatprep.subr.mxu0 0.0
    %352 = vmatpush1.msra.mxu0 0.0
    %353 = vmatprep.subr.mxu0 0.0
    %354 = vmatpush1.msra.mxu0 0.0
    %355 = vmatprep.subr.mxu0 0.0
    %356 = vmatpush1.msra.mxu0 0.0
    %357 = vmatprep.subr.mxu0 0.0
    %358 = vmatpush1.msra.mxu0 0.0
    %359 = vmatprep.subr.mxu0 0.0
    %360 = vmatpush1.msra.mxu0 0.0
    %361 = vmatprep.subr.mxu0 0.0
    %362 = vmatpush1.msra.mxu0 0.0
    %363 = vmatprep.subr.mxu0 0.0
    %364 = vmatpush1.msra.mxu0 0.0
    %365 = vmatprep.subr.mxu0 0.0
    %366 = vmatpush1.msra.mxu0 0.0
    %367 = vmatprep.subr.mxu0 0.0
    %368 = vmatpush1.msra.mxu0 0.0
    %369 = vmatprep.subr.mxu0 0.0
    %370 = vmatpush1.msra.mxu0 0.0
    %371 = vmatprep.mubr.f32.mxu0 0.0
    %372 = vmatmul.mubr.f32.gmra.mrb[0].mxu0 %v282
    %v373 = vpop.f32.mrb[0].mxu0
    %v374 = vadd.f32 %v305, %v373
    %v375 = vpop.f32.mrb[0].mxu0
    %376 = vmatprep.mubr.f32.mxu0 0.0
    %377 = vmatmul.mubr.f32.gmra.mrb[0].mxu0 %v283
    %v378 = vpop.f32.mrb[0].mxu0
    %v379 = vadd.f32 %v305, %v378
    %v380 = vpop.f32.mrb[0].mxu0
    %381 = vdwg.mxu0
    %382 = vmax.xlane.f32.xlu0 %v374
    %v383 = vpop.xlane.xlu0 %382
    %384 = vmax.xlane.f32.xlu0 %v379
    %v385 = vpop.xlane.xlu0 %384
    %v386 = vsub.f32 %v374, %v383
    %v387 = vsub.f32 %v379, %v385
    %v388 = vmul.f32 %v386, 1.442695
    %v389 = vpow.pop %v388
    %v390 = vmul.f32 %v387, 1.442695
    %v391 = vpow.pop %v390
    %392 = vadd.xlane.f32.xlu0 %v389
    %v393 = vpop.xlane.xlu0 %392
    %394 = vadd.xlane.f32.xlu0 %v391
    %v395 = vpop.xlane.xlu0 %394
    %v396 = vlog2.pop %v393
    %v397 = vmul.f32 %v396, 0.6931472
    %v398 = vlog2.pop %v395
    %v399 = vmul.f32 %v398, 0.6931472
    %v400 = vsub.f32 %v386, %v397
    %v401 = vsub.f32 %v387, %v399
    %402 = vst [vmem:[#allocation10] sm:$0xff] %v400
    %403 = vst [vmem:[#allocation10 + $0x8] sm:$0xff] %v401
    // Predicated region
    $region46: #{_fused_forward.1} parent=1 // pred_check
      _
    $region47: #{_fused_forward.1} parent=1 // pred_check_branch
      %405 = sbr.rel (0) target = $region49
    $region48: #{_fused_forward.1} parent=1 // pred_region
      %s407 = ssub.s32 256, 256
      %408 = vsyncadd [#allocation4], %s407
      %s409 = sshll.u32 [#allocation10], 4
      %s410 = int_to_ptr.vmem [resolvable:$true] %s409
      %415 = dma.vmem_to_hbm [thread:$0]  %s410, 256, %s7, [#allocation4], 128, 128, 8
    $region49: #{_fused_forward.1} parent=1 // pred_fallthru
      _
    // Predicated region
    $region50: #{_fused_forward.1} parent=1 // pred_check
      _
    $region51: #{_fused_forward.1} parent=1 // pred_check_branch
      %417 = sbr.rel (0) target = $region53
    $region52: #{_fused_forward.1} parent=1 // pred_region
      %418 = dma.done [#allocation4], 256
    $region53: #{_fused_forward.1} parent=1 // pred_fallthru
      _
    %419 = vsyncpa [#allocation3], 1
    %420 = vsyncpa [#allocation6], 1
    %421 = vsyncpa [#allocation9], 1
    %422 = vsyncpa [#allocation4], 1

</llo_original>
